<compile_context>
chip_gen: v7x
topology: tpu7x:2x2x1
jax: 0.10.0
libtpu: 0.0.40
codegen_flags: <defaults>
</compile_context>

<pallas_src>
import functools

import numpy as np

import jax
import jax.numpy as jnp
from jax.experimental import pallas as pl
from jax.experimental.pallas import tpu as pltpu


def _fused_conv_bn_relu6_kernel(x_ref, w_ref, mask_ref, gb_ref, o_ref,
                                sum_sc, ssq_sc, scale_sc, shift_sc, *,
                                W, KH, KW, count, eps):
    """2-phase fused kernel.

    grid = (2, N); phase = program_id(0), image n = program_id(1).
      phase 0: conv (single folded bf16 MXU matmul) -> per-channel sum / sumsq
               accumulated in VMEM scratch across all images.
      phase 1: recompute conv -> y = conv * scale + shift, clip to [0, 6].
    The f32 conv intermediate never leaves VMEM.
    """
    phase = pl.program_id(0)
    n = pl.program_id(1)

    @pl.when((phase == 0) & (n == 0))
    def _init():
        sum_sc[...] = jnp.zeros_like(sum_sc)
        ssq_sc[...] = jnp.zeros_like(ssq_sc)

    # --- im2col-by-roll slab: (KH*KW*Cin, M), M = H*W on the lane axis -------
    x = x_ref[0]                                   # (Cin, M) f32
    M = x.shape[1]
    taps = []
    for kh in range(KH):
        dh = kh - (KH - 1) // 2
        for kw in range(KW):
            dw = kw - (KW - 1) // 2
            s = dh * W + dw                        # static flat-index shift
            if s == 0:
                tap = x                            # centre tap: no shift, no mask
            else:
                # tap[m] = x[m + s]; wrapped / out-of-image lanes are zeroed by
                # the precomputed boundary mask (XLU roll + f32 VPU multiply).
                tap = pltpu.roll(x, shift=(-s) % M, axis=1)
                tap = tap * mask_ref[kh * KW + kw]          # (1, M) broadcast
            taps.append(tap)
    slab = jnp.concatenate(taps, axis=0).astype(jnp.bfloat16)  # (KH*KW*Cin, M)

    # Single MXU matmul: bf16 operands, f32 accumulation -> (Cout, M).
    conv = jnp.dot(w_ref[...], slab, preferred_element_type=jnp.float32)

    @pl.when(phase == 0)
    def _stats():
        # NOTE: var = E[x^2] - mean^2 accumulated in f32; fine at these counts.
        # For very large N*H*W a shifted-sum / two-pass variance is preferable.
        sum_sc[...] += jnp.sum(conv, axis=1, keepdims=True)          # (Cout, 1)
        ssq_sc[...] += jnp.sum(conv * conv, axis=1, keepdims=True)   # (Cout, 1)

    @pl.when((phase == 1) & (n == 0))
    def _finalize_stats():
        inv_count = 1.0 / count
        mean = sum_sc[...] * inv_count
        var = jnp.maximum(ssq_sc[...] * inv_count - mean * mean, 0.0)
        inv_std = jax.lax.rsqrt(var + eps)
        scale = gb_ref[0] * inv_std                  # gamma * rsqrt(var + eps)
        scale_sc[...] = scale
        shift_sc[...] = gb_ref[1] - mean * scale     # beta - mean * scale

    @pl.when(phase == 1)
    def _normalize():
        y = conv * scale_sc[...] + shift_sc[...]
        o_ref[0] = jnp.clip(y, 0.0, 6.0).astype(o_ref.dtype)
    # Phase 0 leaves o_ref untouched; those block writebacks are dead stores
    # that phase 1 overwrites for every image before the kernel finishes.


def conv_bn_relu6(x_nchw, w_oihw, bias, gamma, beta, eps=1e-5):
    """PyTorch-semantics ConvBNReLU forward. Input/output are NCHW."""
    N, Cin, H, W = x_nchw.shape
    Cout, _, KH, KW = w_oihw.shape
    M = H * W

    # Free reshape: NCHW is contiguous, so the flattened spatial axis lands on
    # the lane dimension.
    x = x_nchw.reshape(N, Cin, M)

    # Weight: OIHW -> (Cout, KH*KW*Cin) bf16; row order matches the in-kernel
    # slab (taps outer, input channels inner).
    w2 = (jnp.transpose(w_oihw, (0, 2, 3, 1))
          .reshape(Cout, KH * KW * Cin).astype(jnp.bfloat16))

    # Pack gamma/beta into one tiny operand: (2, Cout, 1) f32.
    gb = jnp.stack([gamma.reshape(Cout, 1),
                    beta.reshape(Cout, 1)]).astype(jnp.float32)

    # Conv bias cancels exactly in the training-mode BN mean subtraction.
    del bias

    # Precomputed per-tap boundary masks (constant table, KH*KW * M floats).
    m_idx = np.arange(M)
    h_idx = m_idx // W
    w_idx = m_idx % W
    masks_np = np.zeros((KH * KW, 1, M), dtype=np.float32)
    for kh in range(KH):
        dh = kh - (KH - 1) // 2
        for kw in range(KW):
            dw = kw - (KW - 1) // 2
            valid = ((h_idx + dh >= 0) & (h_idx + dh < H) &
                     (w_idx + dw >= 0) & (w_idx + dw < W))
            masks_np[kh * KW + kw, 0, :] = valid.astype(np.float32)
    masks = jnp.asarray(masks_np)

    flops = 2 * 2 * N * M * KH * KW * Cin * Cout     # conv runs in both phases
    bytes_accessed = int(2 * x.size * 4 + w2.size * 2 + masks.size * 4
                         + gb.size * 4 + N * Cout * M * 4)

    # TODO(synk): for non-toy shapes add a lane-dense spatial tile axis
    # (>=512 lanes, with a W-lane halo or per-tile masks) plus Cin/Cout tiling,
    # and on v7x emit per-chunk partial BN stats so the conv phase can shard
    # across both TensorCores instead of the fully "arbitrary" grid used here.
    out = pl.pallas_call(
        functools.partial(_fused_conv_bn_relu6_kernel,
                          W=W, KH=KH, KW=KW,
                          count=float(N * M), eps=float(eps)),
        grid=(2, N),                       # (phase, image); phase 0 runs first
        in_specs=[
            pl.BlockSpec((1, Cin, M), lambda p, n: (n, 0, 0)),
            pl.BlockSpec((Cout, KH * KW * Cin), lambda p, n: (0, 0)),
            pl.BlockSpec((KH * KW, 1, M), lambda p, n: (0, 0, 0)),
            pl.BlockSpec((2, Cout, 1), lambda p, n: (0, 0, 0)),
        ],
        out_specs=pl.BlockSpec((1, Cout, M), lambda p, n: (n, 0, 0)),
        out_shape=jax.ShapeDtypeStruct((N, Cout, M), x_nchw.dtype),
        scratch_shapes=[pltpu.VMEM((Cout, 1), jnp.float32)] * 4,
        compiler_params=pltpu.CompilerParams(
            dimension_semantics=("arbitrary", "arbitrary"),
            vmem_limit_bytes=32 * 1024 * 1024),  # explicit budget; fits v7x 64 MiB
        cost_estimate=pl.CostEstimate(
            flops=flops, transcendentals=Cout, bytes_accessed=bytes_accessed),
    )(x, w2, masks, gb)

    # Free reshape back to NCHW: (N, Cout, H*W) -> (N, Cout, H, W).
    return out.reshape(N, Cout, H, W)


def _reference(x_nchw, w_oihw, bias, gamma, beta, eps=1e-5):
    """Pure-JAX f32 reference of the same forward (for a correctness check)."""
    x = jnp.transpose(x_nchw, (0, 2, 3, 1)).astype(jnp.float32)
    w = jnp.transpose(w_oihw, (2, 3, 1, 0)).astype(jnp.float32)
    y = jax.lax.conv_general_dilated(
        x, w, window_strides=(1, 1), padding="SAME",
        dimension_numbers=("NHWC", "HWIO", "NHWC"),
        precision=jax.lax.Precision.HIGHEST)
    y = y + bias.reshape(1, 1, 1, -1)
    mean = jnp.mean(y, axis=(0, 1, 2), keepdims=True)
    var = jnp.mean((y - mean) ** 2, axis=(0, 1, 2), keepdims=True)
    y = (y - mean) * jax.lax.rsqrt(var + eps)
    y = y * gamma.reshape(1, 1, 1, -1) + beta.reshape(1, 1, 1, -1)
    y = jnp.clip(y, 0.0, 6.0)
    return jnp.transpose(y, (0, 3, 1, 2))


if __name__ == "__main__":
    key = jax.random.PRNGKey(0)
    k_x, k_w, k_b, k_g, k_be = jax.random.split(key, 5)

    N, Cin, Hs, Ws = 2, 4, 16, 16
    Cout, K = 8, 3

    x = jax.random.normal(k_x, (N, Cin, Hs, Ws), dtype=jnp.float32)
    # Conv2d weight (out_chan, in_chan, kH, kW) + bias, deterministic init.
    w = 0.1 * jax.random.normal(k_w, (Cout, Cin, K, K), dtype=jnp.float32)
    b = 0.1 * jax.random.normal(k_b, (Cout,), dtype=jnp.float32)
    # BatchNorm2d affine params (non-trivial values to exercise the broadcast).
    gamma = 1.0 + 0.1 * jax.random.normal(k_g, (Cout,), dtype=jnp.float32)
    beta = 0.1 * jax.random.normal(k_be, (Cout,), dtype=jnp.float32)

    out = conv_bn_relu6(x, w, b, gamma, beta)
    out = jax.block_until_ready(out)

    ref = jax.block_until_ready(_reference(x, w, b, gamma, beta))
    assert out.shape == (N, Cout, Hs, Ws)
    # bf16 MXU operands (intentional, per perf review) -> slightly looser
    # tolerance than the pure-f32 version.
    assert jnp.allclose(out, ref, atol=2e-2, rtol=2e-2)

    print("KERNEL_OK")
</pallas_src>

<mosaic_0001>
module attributes {stable_mosaic.version = 11 : i64} {
  func.func @_fused_conv_bn_relu6_kernel(%arg0: i32, %arg1: i32, %arg2: memref<1x4x256xf32, #tpu.memory_space<vmem>>, %arg3: memref<8x36xbf16, #tpu.memory_space<vmem>>, %arg4: memref<9x1x256xf32, #tpu.memory_space<vmem>>, %arg5: memref<2x8x1xf32, #tpu.memory_space<vmem>>, %arg6: memref<1x8x256xf32, #tpu.memory_space<vmem>>, %arg7: memref<8x1xf32, #tpu.memory_space<vmem>>, %arg8: memref<8x1xf32, #tpu.memory_space<vmem>>, %arg9: memref<8x1xf32, #tpu.memory_space<vmem>>, %arg10: memref<8x1xf32, #tpu.memory_space<vmem>>) attributes {dimension_semantics = [#tpu.dimension_semantics<arbitrary>, #tpu.dimension_semantics<arbitrary>], iteration_bounds = array<i64: 2, 2>, scalar_prefetch = 0 : i64, scratch_operands = 4 : i64, tpu.core_type = #tpu.core_type<tc>, window_params = [{transform_indices = @transform_0, window_bounds = array<i64: 1, 4, 256>}, {pipeline_mode = #tpu.pipeline_mode<synchronous>, transform_indices = @transform_1, window_bounds = array<i64: 8, 36>}, {pipeline_mode = #tpu.pipeline_mode<synchronous>, transform_indices = @transform_2, window_bounds = array<i64: 9, 1, 256>}, {pipeline_mode = #tpu.pipeline_mode<synchronous>, transform_indices = @transform_3, window_bounds = array<i64: 2, 8, 1>}, {transform_indices = @transform_4, window_bounds = array<i64: 1, 8, 256>}]} {
    %c0_i32 = arith.constant 0 : i32
    %0 = arith.cmpi eq, %arg0, %c0_i32 : i32
    %c0_i32_0 = arith.constant 0 : i32
    %1 = arith.cmpi eq, %arg1, %c0_i32_0 : i32
    %2 = arith.andi %0, %1 : i1
    %3 = arith.extui %2 : i1 to i32
    %c0_i32_1 = arith.constant 0 : i32
    %4 = arith.cmpi ne, %3, %c0_i32_1 : i32
    scf.if %4 {
      %cst_30 = arith.constant 0.000000e+00 : f32
      %62 = vector.broadcast %cst_30 : f32 to vector<8x1xf32>
      %c0_31 = arith.constant 0 : index
      %c0_32 = arith.constant 0 : index
      %63 = vector.load %arg7[%c0_31, %c0_32] : memref<8x1xf32, #tpu.memory_space<vmem>>, vector<8x1xf32>
      tpu.vector_store %arg7[%c0_31, %c0_32], %62 {strides = array<i32>} : memref<8x1xf32, #tpu.memory_space<vmem>>, vector<8x1xf32>,
      %cst_33 = arith.constant 0.000000e+00 : f32
      %64 = vector.broadcast %cst_33 : f32 to vector<8x1xf32>
      %c0_34 = arith.constant 0 : index
      %c0_35 = arith.constant 0 : index
      %65 = vector.load %arg8[%c0_34, %c0_35] : memref<8x1xf32, #tpu.memory_space<vmem>>, vector<8x1xf32>
      tpu.vector_store %arg8[%c0_34, %c0_35], %64 {strides = array<i32>} : memref<8x1xf32, #tpu.memory_space<vmem>>, vector<8x1xf32>,
    } else {
    }
    %c0 = arith.constant 0 : index
    %c0_2 = arith.constant 0 : index
    %c0_3 = arith.constant 0 : index
    %5 = vector.load %arg2[%c0, %c0_2, %c0_3] : memref<1x4x256xf32, #tpu.memory_space<vmem>>, vector<1x4x256xf32>
    %6 = vector.shape_cast %5 : vector<1x4x256xf32> to vector<4x256xf32>
    %c17_i32 = arith.constant 17 : i32
    %7 = tpu.dynamic_rotate %6 by %c17_i32 dim 1 : vector<4x256xf32>, i32 -> vector<4x256xf32>
    %c0_4 = arith.constant 0 : index
    %c0_5 = arith.constant 0 : index
    %c0_6 = arith.constant 0 : index
    %8 = vector.load %arg4[%c0_4, %c0_5, %c0_6] : memref<9x1x256xf32, #tpu.memory_space<vmem>>, vector<1x1x256xf32>
    %9 = vector.shape_cast %8 : vector<1x1x256xf32> to vector<1x256xf32>
    %10 = vector.broadcast %9 : vector<1x256xf32> to vector<4x256xf32>
    %11 = arith.mulf %7, %10 : vector<4x256xf32>
    %c16_i32 = arith.constant 16 : i32
    %12 = tpu.dynamic_rotate %6 by %c16_i32 dim 1 : vector<4x256xf32>, i32 -> vector<4x256xf32>
    %c1 = arith.constant 1 : index
    %c0_7 = arith.constant 0 : index
    %c0_8 = arith.constant 0 : index
    %13 = vector.load %arg4[%c1, %c0_7, %c0_8] : memref<9x1x256xf32, #tpu.memory_space<vmem>>, vector<1x1x256xf32>
    %14 = vector.shape_cast %13 : vector<1x1x256xf32> to vector<1x256xf32>
    %15 = vector.broadcast %14 : vector<1x256xf32> to vector<4x256xf32>
    %16 = arith.mulf %12, %15 : vector<4x256xf32>
    %c15_i32 = arith.constant 15 : i32
    %17 = tpu.dynamic_rotate %6 by %c15_i32 dim 1 : vector<4x256xf32>, i32 -> vector<4x256xf32>
    %c2 = arith.constant 2 : index
    %c0_9 = arith.constant 0 : index
    %c0_10 = arith.constant 0 : index
    %18 = vector.load %arg4[%c2, %c0_9, %c0_10] : memref<9x1x256xf32, #tpu.memory_space<vmem>>, vector<1x1x256xf32>
    %19 = vector.shape_cast %18 : vector<1x1x256xf32> to vector<1x256xf32>
    %20 = vector.broadcast %19 : vector<1x256xf32> to vector<4x256xf32>
    %21 = arith.mulf %17, %20 : vector<4x256xf32>
    %c1_i32 = arith.constant 1 : i32
    %22 = tpu.dynamic_rotate %6 by %c1_i32 dim 1 : vector<4x256xf32>, i32 -> vector<4x256xf32>
    %c3 = arith.constant 3 : index
    %c0_11 = arith.constant 0 : index
    %c0_12 = arith.constant 0 : index
    %23 = vector.load %arg4[%c3, %c0_11, %c0_12] : memref<9x1x256xf32, #tpu.memory_space<vmem>>, vector<1x1x256xf32>
    %24 = vector.shape_cast %23 : vector<1x1x256xf32> to vector<1x256xf32>
    %25 = vector.broadcast %24 : vector<1x256xf32> to vector<4x256xf32>
    %26 = arith.mulf %22, %25 : vector<4x256xf32>
    %c255_i32 = arith.constant 255 : i32
    %27 = tpu.dynamic_rotate %6 by %c255_i32 dim 1 : vector<4x256xf32>, i32 -> vector<4x256xf32>
    %c5 = arith.constant 5 : index
    %c0_13 = arith.constant 0 : index
    %c0_14 = arith.constant 0 : index
    %28 = vector.load %arg4[%c5, %c0_13, %c0_14] : memref<9x1x256xf32, #tpu.memory_space<vmem>>, vector<1x1x256xf32>
    %29 = vector.shape_cast %28 : vector<1x1x256xf32> to vector<1x256xf32>
    %30 = vector.broadcast %29 : vector<1x256xf32> to vector<4x256xf32>
    %31 = arith.mulf %27, %30 : vector<4x256xf32>
    %c241_i32 = arith.constant 241 : i32
    %32 = tpu.dynamic_rotate %6 by %c241_i32 dim 1 : vector<4x256xf32>, i32 -> vector<4x256xf32>
    %c6 = arith.constant 6 : index
    %c0_15 = arith.constant 0 : index
    %c0_16 = arith.constant 0 : index
    %33 = vector.load %arg4[%c6, %c0_15, %c0_16] : memref<9x1x256xf32, #tpu.memory_space<vmem>>, vector<1x1x256xf32>
    %34 = vector.shape_cast %33 : vector<1x1x256xf32> to vector<1x256xf32>
    %35 = vector.broadcast %34 : vector<1x256xf32> to vector<4x256xf32>
    %36 = arith.mulf %32, %35 : vector<4x256xf32>
    %c240_i32 = arith.constant 240 : i32
    %37 = tpu.dynamic_rotate %6 by %c240_i32 dim 1 : vector<4x256xf32>, i32 -> vector<4x256xf32>
    %c7 = arith.constant 7 : index
    %c0_17 = arith.constant 0 : index
    %c0_18 = arith.constant 0 : index
    %38 = vector.load %arg4[%c7, %c0_17, %c0_18] : memref<9x1x256xf32, #tpu.memory_space<vmem>>, vector<1x1x256xf32>
    %39 = vector.shape_cast %38 : vector<1x1x256xf32> to vector<1x256xf32>
    %40 = vector.broadcast %39 : vector<1x256xf32> to vector<4x256xf32>
    %41 = arith.mulf %37, %40 : vector<4x256xf32>
    %c239_i32 = arith.constant 239 : i32
    %42 = tpu.dynamic_rotate %6 by %c239_i32 dim 1 : vector<4x256xf32>, i32 -> vector<4x256xf32>
    %c8 = arith.constant 8 : index
    %c0_19 = arith.constant 0 : index
    %c0_20 = arith.constant 0 : index
    %43 = vector.load %arg4[%c8, %c0_19, %c0_20] : memref<9x1x256xf32, #tpu.memory_space<vmem>>, vector<1x1x256xf32>
    %44 = vector.shape_cast %43 : vector<1x1x256xf32> to vector<1x256xf32>
    %45 = vector.broadcast %44 : vector<1x256xf32> to vector<4x256xf32>
    %46 = arith.mulf %42, %45 : vector<4x256xf32>
    %47 = tpu.concatenate %11, %16, %21, %26, %6, %31, %36, %41, %46 in 0 : vector<4x256xf32>, vector<4x256xf32>, vector<4x256xf32>, vector<4x256xf32>, vector<4x256xf32>, vector<4x256xf32>, vector<4x256xf32>, vector<4x256xf32>, vector<4x256xf32> -> vector<36x256xf32>
    %48 = arith.truncf %47 : vector<36x256xf32> to vector<36x256xbf16>
    %c0_21 = arith.constant 0 : index
    %c0_22 = arith.constant 0 : index
    %49 = vector.load %arg3[%c0_21, %c0_22] : memref<8x36xbf16, #tpu.memory_space<vmem>>, vector<8x36xbf16>
    %cst = arith.constant dense<0.000000e+00> : vector<8x256xf32>
    %50 = tpu.matmul %49, %48, %cst {dimension_numbers = #tpu.dot_dimension_numbers<[1], [0], [0], [1], [0, 0, 1, 1], [], []>} : vector<8x36xbf16>, vector<36x256xbf16>, vector<8x256xf32> -> vector<8x256xf32>
    %c0_i32_23 = arith.constant 0 : i32
    %51 = arith.cmpi eq, %arg0, %c0_i32_23 : i32
    %52 = arith.extui %51 : i1 to i32
    %c0_i32_24 = arith.constant 0 : i32
    %53 = arith.cmpi ne, %52, %c0_i32_24 : i32
    scf.if %53 {
      %c0_30 = arith.constant 0 : index
      %c0_31 = arith.constant 0 : index
      %62 = vector.load %arg7[%c0_30, %c0_31] : memref<8x1xf32, #tpu.memory_space<vmem>>, vector<8x1xf32>
      %cst_32 = arith.constant dense<0.000000e+00> : vector<8xf32>
      %63 = vector.multi_reduction <add>, %50, %cst_32 [1] : vector<8x256xf32> to vector<8xf32>
      %64 = vector.shape_cast %63 : vector<8xf32> to vector<8x1xf32>
      %65 = arith.addf %62, %64 : vector<8x1xf32>
      %c0_33 = arith.constant 0 : index
      %c0_34 = arith.constant 0 : index
      %66 = vector.load %arg7[%c0_33, %c0_34] : memref<8x1xf32, #tpu.memory_space<vmem>>, vector<8x1xf32>
      tpu.vector_store %arg7[%c0_33, %c0_34], %65 {strides = array<i32>} : memref<8x1xf32, #tpu.memory_space<vmem>>, vector<8x1xf32>,
      %c0_35 = arith.constant 0 : index
      %c0_36 = arith.constant 0 : index
      %67 = vector.load %arg8[%c0_35, %c0_36] : memref<8x1xf32, #tpu.memory_space<vmem>>, vector<8x1xf32>
      %68 = arith.mulf %50, %50 : vector<8x256xf32>
      %cst_37 = arith.constant dense<0.000000e+00> : vector<8xf32>
      %69 = vector.multi_reduction <add>, %68, %cst_37 [1] : vector<8x256xf32> to vector<8xf32>
      %70 = vector.shape_cast %69 : vector<8xf32> to vector<8x1xf32>
      %71 = arith.addf %67, %70 : vector<8x1xf32>
      %c0_38 = arith.constant 0 : index
      %c0_39 = arith.constant 0 : index
      %72 = vector.load %arg8[%c0_38, %c0_39] : memref<8x1xf32, #tpu.memory_space<vmem>>, vector<8x1xf32>
      tpu.vector_store %arg8[%c0_38, %c0_39], %71 {strides = array<i32>} : memref<8x1xf32, #tpu.memory_space<vmem>>, vector<8x1xf32>,
    } else {
    }
    %c1_i32_25 = arith.constant 1 : i32
    %54 = arith.cmpi eq, %arg0, %c1_i32_25 : i32
    %c0_i32_26 = arith.constant 0 : i32
    %55 = arith.cmpi eq, %arg1, %c0_i32_26 : i32
    %56 = arith.andi %54, %55 : i1
    %57 = arith.extui %56 : i1 to i32
    %c0_i32_27 = arith.constant 0 : i32
    %58 = arith.cmpi ne, %57, %c0_i32_27 : i32
    scf.if %58 {
      %c0_30 = arith.constant 0 : index
      %c0_31 = arith.constant 0 : index
      %62 = vector.load %arg7[%c0_30, %c0_31] : memref<8x1xf32, #tpu.memory_space<vmem>>, vector<8x1xf32>
      %cst_32 = arith.constant 0.001953125 : f32
      %63 = vector.broadcast %cst_32 : f32 to vector<8x1xf32>
      %64 = arith.mulf %62, %63 : vector<8x1xf32>
      %c0_33 = arith.constant 0 : index
      %c0_34 = arith.constant 0 : index
      %65 = vector.load %arg8[%c0_33, %c0_34] : memref<8x1xf32, #tpu.memory_space<vmem>>, vector<8x1xf32>
      %cst_35 = arith.constant 0.001953125 : f32
      %66 = vector.broadcast %cst_35 : f32 to vector<8x1xf32>
      %67 = arith.mulf %65, %66 : vector<8x1xf32>
      %68 = arith.mulf %64, %64 : vector<8x1xf32>
      %69 = arith.subf %67, %68 : vector<8x1xf32>
      %cst_36 = arith.constant 0.000000e+00 : f32
      %70 = vector.broadcast %cst_36 : f32 to vector<8x1xf32>
      %71 = arith.maximumf %69, %70 : vector<8x1xf32>
      %cst_37 = arith.constant 9.99999974E-6 : f32
      %72 = vector.broadcast %cst_37 : f32 to vector<8x1xf32>
      %73 = arith.addf %71, %72 : vector<8x1xf32>
      %74 = math.rsqrt %73 : vector<8x1xf32>
      %c0_38 = arith.constant 0 : index
      %c0_39 = arith.constant 0 : index
      %c0_40 = arith.constant 0 : index
      %75 = vector.load %arg5[%c0_38, %c0_39, %c0_40] : memref<2x8x1xf32, #tpu.memory_space<vmem>>, vector<1x8x1xf32>
      %76 = vector.shape_cast %75 : vector<1x8x1xf32> to vector<8x1xf32>
      %77 = arith.mulf %76, %74 : vector<8x1xf32>
      %c0_41 = arith.constant 0 : index
      %c0_42 = arith.constant 0 : index
      %78 = vector.load %arg9[%c0_41, %c0_42] : memref<8x1xf32, #tpu.memory_space<vmem>>, vector<8x1xf32>
      tpu.vector_store %arg9[%c0_41, %c0_42], %77 {strides = array<i32>} : memref<8x1xf32, #tpu.memory_space<vmem>>, vector<8x1xf32>,
      %c1_43 = arith.constant 1 : index
      %c0_44 = arith.constant 0 : index
      %c0_45 = arith.constant 0 : index
      %79 = vector.load %arg5[%c1_43, %c0_44, %c0_45] : memref<2x8x1xf32, #tpu.memory_space<vmem>>, vector<1x8x1xf32>
      %80 = vector.shape_cast %79 : vector<1x8x1xf32> to vector<8x1xf32>
      %81 = arith.mulf %64, %77 : vector<8x1xf32>
      %82 = arith.subf %80, %81 : vector<8x1xf32>
      %c0_46 = arith.constant 0 : index
      %c0_47 = arith.constant 0 : index
      %83 = vector.load %arg10[%c0_46, %c0_47] : memref<8x1xf32, #tpu.memory_space<vmem>>, vector<8x1xf32>
      tpu.vector_store %arg10[%c0_46, %c0_47], %82 {strides = array<i32>} : memref<8x1xf32, #tpu.memory_space<vmem>>, vector<8x1xf32>,
    } else {
    }
    %c1_i32_28 = arith.constant 1 : i32
    %59 = arith.cmpi eq, %arg0, %c1_i32_28 : i32
    %60 = arith.extui %59 : i1 to i32
    %c0_i32_29 = arith.constant 0 : i32
    %61 = arith.cmpi ne, %60, %c0_i32_29 : i32
    scf.if %61 {
      %c0_30 = arith.constant 0 : index
      %c0_31 = arith.constant 0 : index
      %62 = vector.load %arg9[%c0_30, %c0_31] : memref<8x1xf32, #tpu.memory_space<vmem>>, vector<8x1xf32>
      %63 = vector.broadcast %62 : vector<8x1xf32> to vector<8x256xf32>
      %64 = arith.mulf %50, %63 : vector<8x256xf32>
      %c0_32 = arith.constant 0 : index
      %c0_33 = arith.constant 0 : index
      %65 = vector.load %arg10[%c0_32, %c0_33] : memref<8x1xf32, #tpu.memory_space<vmem>>, vector<8x1xf32>
      %66 = vector.broadcast %65 : vector<8x1xf32> to vector<8x256xf32>
      %67 = arith.addf %64, %66 : vector<8x256xf32>
      %cst_34 = arith.constant 0.000000e+00 : f32
      %cst_35 = arith.constant 6.000000e+00 : f32
      %68 = vector.broadcast %cst_34 : f32 to vector<8x256xf32>
      %69 = arith.maximumf %68, %67 : vector<8x256xf32>
      %70 = vector.broadcast %cst_35 : f32 to vector<8x256xf32>
      %71 = arith.minimumf %70, %69 : vector<8x256xf32>
      %c0_36 = arith.constant 0 : index
      %c0_37 = arith.constant 0 : index
      %c0_38 = arith.constant 0 : index
      %72 = vector.load %arg6[%c0_36, %c0_37, %c0_38] : memref<1x8x256xf32, #tpu.memory_space<vmem>>, vector<1x8x256xf32>
      %73 = vector.shape_cast %72 : vector<1x8x256xf32> to vector<8x256xf32>
      %74 = vector.shape_cast %71 : vector<8x256xf32> to vector<1x8x256xf32>
      tpu.vector_store %arg6[%c0_36, %c0_37, %c0_38], %74 {strides = array<i32>} : memref<1x8x256xf32, #tpu.memory_space<vmem>>, vector<1x8x256xf32>,
    } else {
    }
    return
  }
  func.func @transform_0(%arg0: i32, %arg1: i32) -> (i32, i32, i32) {
    %c0_i32 = arith.constant 0 : i32
    %c0_i32_0 = arith.constant 0 : i32
    %c0_i32_1 = arith.constant 0 : i32
    return %arg1, %c0_i32, %c0_i32_0 : i32, i32, i32
  }
  func.func @transform_1(%arg0: i32, %arg1: i32) -> (i32, i32) {
    %c0_i32 = arith.constant 0 : i32
    %c0_i32_0 = arith.constant 0 : i32
    %c0_i32_1 = arith.constant 0 : i32
    return %c0_i32, %c0_i32_0 : i32, i32
  }
  func.func @transform_2(%arg0: i32, %arg1: i32) -> (i32, i32, i32) {
    %c0_i32 = arith.constant 0 : i32
    %c0_i32_0 = arith.constant 0 : i32
    %c0_i32_1 = arith.constant 0 : i32
    %c0_i32_2 = arith.constant 0 : i32
    return %c0_i32, %c0_i32_0, %c0_i32_1 : i32, i32, i32
  }
  func.func @transform_3(%arg0: i32, %arg1: i32) -> (i32, i32, i32) {
    %c0_i32 = arith.constant 0 : i32
    %c0_i32_0 = arith.constant 0 : i32
    %c0_i32_1 = arith.constant 0 : i32
    %c0_i32_2 = arith.constant 0 : i32
    return %c0_i32, %c0_i32_0, %c0_i32_1 : i32, i32, i32
  }
  func.func @transform_4(%arg0: i32, %arg1: i32) -> (i32, i32, i32) {
    %c0_i32 = arith.constant 0 : i32
    %c0_i32_0 = arith.constant 0 : i32
    %c0_i32_1 = arith.constant 0 : i32
    return %arg1, %c0_i32, %c0_i32_0 : i32, i32, i32
  }
}

</mosaic_0001>

<llo_original>
// kernel: tpu_custom_call.1
$region0: #{tpu_custom_call.1}
  #allocation0 [shape = 'u32[]', space=smem, size = 0x4, offset = 0x4, fixed_abs, tag = 'smem constant byte address 0x4 - core index']
  #allocation1 [shape = 'u32[144,128]{1,0:T(1,128)}', space=vmem, size = 0x12000, scoped, tag = 'internal scratch']
  #allocation2 [shape = 'f32[8,1]{1,0:T(8,128)}', space=vmem, size = 0x1000, scoped, tag = 'scratch operand']
  #allocation3 [shape = 'f32[8,1]{1,0:T(8,128)}', space=vmem, size = 0x1000, scoped, tag = 'scratch operand']
  #allocation4 [shape = 'f32[8,1]{1,0:T(8,128)}', space=vmem, size = 0x1000, scoped, tag = 'scratch operand']
  #allocation5 [shape = 'f32[8,1]{1,0:T(8,128)}', space=vmem, size = 0x1000, scoped, tag = 'scratch operand']
  %s0 = inlined_call_operand.hbm [shape: f32[2,4,256], index: 0, kind: input, shape index: {}]
  %s1 = inlined_call_operand.vmem [shape: bf16[8,36], index: 1, kind: input, shape index: {}]
  %s2 = inlined_call_operand.vmem [shape: f32[9,1,256], index: 2, kind: input, shape index: {}]
  %s3 = inlined_call_operand.vmem [shape: f32[2,8,1], index: 3, kind: input, shape index: {}]
  %s4 = inlined_call_operand.hbm [shape: f32[2,8,256], index: 4, kind: output, shape index: {}]
  %s5 = sld [smem:[#allocation0]]
  $region69: #{tpu_custom_call.1} parent=0
    _
  %s7 = ssub.s32 1, %s5
  %s8 = scalar_select 0, %s7, %s5
  $region1: #{tpu_custom_call.1} parent=0
    #allocation6 [shape = 'u8[8192]{0}', space=vmem, size = 0x2000, scoped, tag = 'input window, operand 0']
    #allocation7 [shape = 's32[2]{0}', space=sflag, size = 0x8, scoped, tag = 'scoped memory for tpu_custom_call.1']
    #allocation8 [shape = 's32[2]{0}', space=sflag, size = 0x8, scoped, tag = 'scoped memory for tpu_custom_call.1']
    #allocation9 [shape = 'u8[16384]{0}', space=vmem, size = 0x4000, scoped, tag = 'output window, operand 0']
    %9 = vsyncpa [#allocation7], 0
    %s10 = scalar_lea.sflag [#allocation7], 1
    %11 = vsyncpa %s10, 0
    %12 = vsyncpa [#allocation8], 0
    %s13 = scalar_lea.sflag [#allocation8], 1
    %14 = vsyncpa %s13, 0
    loop: start=0, step=1, limit=6
    $region2: #{tpu_custom_call.1} parent=1 // loop_pre_header
      _
    $region3: #{tpu_custom_call.1} parent=1 // loop_header
      %s16 = sphi 0, %s20
      %p17 = scmp.ge.s32.totalorder %s16, 6
      %s23 = sphi 0, %s35
      %s24 = sphi 0, %s31
      %s25 = sphi 0, %s23
      %s26 = sphi 0, %s24
      %s27 = sphi 0, %s25
      %s28 = sphi 0, %s26
      %s38 = sphi 0, %s40
      %s41 = sphi 0, %s38
      %s42 = sphi 0, %s41
      %s58 = sphi 0, %s42
      %s62 = sphi 0, %s62
      %s64 = sphi 0, %s62
      %s65 = sphi 0, %s64
      %s79 = sphi 0, %s65
      %s83 = sphi 0, %s83
      %s85 = sphi 0, %s83
      %s86 = sphi 0, %s85
      %s100 = sphi 0, %s86
      %s104 = sphi 0, %s104
      %s106 = sphi 0, %s104
      %s107 = sphi 0, %s106
      %s121 = sphi 0, %s107
      %s127 = sphi 0, %s129
      %s130 = sphi 0, %s127
      %s131 = sphi 0, %s130
      %s147 = sphi 0, %s131
    $region4: #{tpu_custom_call.1} parent=1 // loop_header_branch
      %19 = sbr.rel (%p17) target = $region8
    $region5: #{tpu_custom_call.1} parent=1 // loop_body
      %s21 = ssub.s32 %s16, 1
      %s22 = ssub.s32 %s16, 2
      %s29 = sadd.s32 1, %s24
      %p30 = scmp.ge.s32.totalorder %s29, 2
      %s31 = scalar_select %p30, 0, %s29
      %s32 = sadd.s32 1, %s23
      %s33 = scalar_select %p30, %s32, %s23
      %p34 = scmp.ge.s32.totalorder %s33, 2
      %s35 = scalar_select %p34, 0, %s33
      %s36 = ssub.s32 %s24, %s31
      %p37 = scmp.eq.s32.totalorder %s36, 0
      %s39 = sadd.s32 %s38, 1
      %s40 = scalar_select %p37, %s38, %s39
      %p43 = pneg %p37
      %p44 = scmp.eq.s32.totalorder %s16, 3
      %p45 = por %p43, %p44
      %p46 = scmp.ne.s32.totalorder %s38, %s41
      %p47 = scmp.eq.s32.totalorder %s16, 0
      %p48 = por %p46, %p47
      %p49 = scmp.ne.s32.totalorder %s38, %s41
      %p50 = scmp.eq.s32.totalorder %s21, 3
      %p51 = por %p49, %p50
      %p52 = scmp.ne.s32.totalorder %s41, %s42
      %p53 = scmp.eq.s32.totalorder %s21, 0
      %p54 = por %p52, %p53
      %p55 = scmp.ne.s32.totalorder %s41, %s42
      %p56 = scmp.eq.s32.totalorder %s22, 3
      %p57 = por %p55, %p56
      %p59 = scmp.ne.s32.totalorder %s42, %s58
      %p60 = scmp.eq.s32.totalorder %s22, 0
      %p61 = por %p59, %p60
      %s63 = sadd.s32 %s62, 1
      %p66 = scmp.eq.s32.totalorder %s16, 3
      %p67 = scmp.ne.s32.totalorder %s62, %s64
      %p68 = scmp.eq.s32.totalorder %s16, 0
      %p69 = por %p67, %p68
      %p70 = scmp.ne.s32.totalorder %s62, %s64
      %p71 = scmp.eq.s32.totalorder %s21, 3
      %p72 = por %p70, %p71
      %p73 = scmp.ne.s32.totalorder %s64, %s65
      %p74 = scmp.eq.s32.totalorder %s21, 0
      %p75 = por %p73, %p74
      %p76 = scmp.ne.s32.totalorder %s64, %s65
      %p77 = scmp.eq.s32.totalorder %s22, 3
      %p78 = por %p76, %p77
      %p80 = scmp.ne.s32.totalorder %s65, %s79
      %p81 = scmp.eq.s32.totalorder %s22, 0
      %p82 = por %p80, %p81
      %s84 = sadd.s32 %s83, 1
      %p87 = scmp.eq.s32.totalorder %s16, 3
      %p88 = scmp.ne.s32.totalorder %s83, %s85
      %p89 = scmp.eq.s32.totalorder %s16, 0
      %p90 = por %p88, %p89
      %p91 = scmp.ne.s32.totalorder %s83, %s85
      %p92 = scmp.eq.s32.totalorder %s21, 3
      %p93 = por %p91, %p92
      %p94 = scmp.ne.s32.totalorder %s85, %s86
      %p95 = scmp.eq.s32.totalorder %s21, 0
      %p96 = por %p94, %p95
      %p97 = scmp.ne.s32.totalorder %s85, %s86
      %p98 = scmp.eq.s32.totalorder %s22, 3
      %p99 = por %p97, %p98
      %p101 = scmp.ne.s32.totalorder %s86, %s100
      %p102 = scmp.eq.s32.totalorder %s22, 0
      %p103 = por %p101, %p102
      %s105 = sadd.s32 %s104, 1
      %p108 = scmp.eq.s32.totalorder %s16, 3
      %p109 = scmp.ne.s32.totalorder %s104, %s106
      %p110 = scmp.eq.s32.totalorder %s16, 0
      %p111 = por %p109, %p110
      %p112 = scmp.ne.s32.totalorder %s104, %s106
      %p113 = scmp.eq.s32.totalorder %s21, 3
      %p114 = por %p112, %p113
      %p115 = scmp.ne.s32.totalorder %s106, %s107
      %p116 = scmp.eq.s32.totalorder %s21, 0
      %p117 = por %p115, %p116
      %p118 = scmp.ne.s32.totalorder %s106, %s107
      %p119 = scmp.eq.s32.totalorder %s22, 3
      %p120 = por %p118, %p119
      %p122 = scmp.ne.s32.totalorder %s107, %s121
      %p123 = scmp.eq.s32.totalorder %s22, 0
      %p124 = por %p122, %p123
      %s125 = ssub.s32 %s24, %s31
      %p126 = scmp.eq.s32.totalorder %s125, 0
      %s128 = sadd.s32 %s127, 1
      %s129 = scalar_select %p126, %s127, %s128
      %p132 = pneg %p126
      %p133 = scmp.eq.s32.totalorder %s16, 3
      %p134 = por %p132, %p133
      %p135 = scmp.ne.s32.totalorder %s127, %s130
      %p136 = scmp.eq.s32.totalorder %s16, 0
      %p137 = por %p135, %p136
      %p138 = scmp.ne.s32.totalorder %s127, %s130
      %p139 = scmp.eq.s32.totalorder %s21, 3
      %p140 = por %p138, %p139
      %p141 = scmp.ne.s32.totalorder %s130, %s131
      %p142 = scmp.eq.s32.totalorder %s21, 0
      %p143 = por %p141, %p142
      %p144 = scmp.ne.s32.totalorder %s130, %s131
      %p145 = scmp.eq.s32.totalorder %s22, 3
      %p146 = por %p144, %p145
      %p148 = scmp.ne.s32.totalorder %s131, %s147
      %p149 = scmp.eq.s32.totalorder %s22, 0
      %p150 = por %p148, %p149
      %p151 = scmp.le.s32.totalorder 1, %s16
      %p152 = scmp.lt.s32.totalorder %s16, 5
      %p153 = pnand %p151, %p152
      %p154 = pneg %p153
      // Predicated region
      $region9: #{tpu_custom_call.1} parent=5 // pred_check
        _
      $region10: #{tpu_custom_call.1} parent=5 // pred_check_branch
        %156 = sbr.rel (%p153) target = $region12
      $region11: #{tpu_custom_call.1} parent=5 // pred_region
        %s157 = ssub.s32 %s16, 1
        // Predicated region
        $region13: #{tpu_custom_call.1} parent=11 // pred_check
          %p158 = pneg %p75
        $region14: #{tpu_custom_call.1} parent=11 // pred_check_branch
          %160 = sbr.rel (%p158) target = $region16
        $region15: #{tpu_custom_call.1} parent=11 // pred_region
          _
        $region16: #{tpu_custom_call.1} parent=11 // pred_fallthru
          _
        // Predicated region
        $region17: #{tpu_custom_call.1} parent=11 // pred_check
          %p161 = pneg %p96
        $region18: #{tpu_custom_call.1} parent=11 // pred_check_branch
          %163 = sbr.rel (%p161) target = $region20
        $region19: #{tpu_custom_call.1} parent=11 // pred_region
          _
        $region20: #{tpu_custom_call.1} parent=11 // pred_fallthru
          _
        // Predicated region
        $region21: #{tpu_custom_call.1} parent=11 // pred_check
          %p164 = pneg %p117
        $region22: #{tpu_custom_call.1} parent=11 // pred_check_branch
          %166 = sbr.rel (%p164) target = $region24
        $region23: #{tpu_custom_call.1} parent=11 // pred_region
          _
        $region24: #{tpu_custom_call.1} parent=11 // pred_fallthru
          _
      $region12: #{tpu_custom_call.1} parent=5 // pred_fallthru
        _
      %p167 = scmp.lt.s32.totalorder %s16, 4
      // Predicated region
      $region25: #{tpu_custom_call.1} parent=5 // pred_check
        %p168 = pneg %p167
      $region26: #{tpu_custom_call.1} parent=5 // pred_check_branch
        %170 = sbr.rel (%p168) target = $region28
      $region27: #{tpu_custom_call.1} parent=5 // pred_region
        // Predicated region
        $region29: #{tpu_custom_call.1} parent=27 // pred_check
          %p171 = pneg %p48
        $region30: #{tpu_custom_call.1} parent=27 // pred_check_branch
          %173 = sbr.rel (%p171) target = $region32
        $region31: #{tpu_custom_call.1} parent=27 // pred_region
          %s174 = sand.u32 %s38, 1
          %s175 = scalar_lea.sflag [#allocation7], %s174
          %s176 = sand.u32 %s38, 1
          %s177 = smul.addr %s176, 8
          %s178 = scalar_lea.vmem [#allocation6], %s177
          %s180 = ssub.s32 128, 128
          %181 = vsyncadd %s175, %s180
          %s182 = smul.addr %s24, 2
          %s183 = smul.addr %s182, 64
          %s184 = scalar_lea.hbm %s0, %s183
          %s186 = sshll.u32 %s178, 4
          %s187 = int_to_ptr.vmem [resolvable:$true] %s186
          %189 = dma.hbm_to_vmem [thread:$0]  %s184, 128, %s187, %s175
        $region32: #{tpu_custom_call.1} parent=27 // pred_fallthru
          _
      $region28: #{tpu_custom_call.1} parent=5 // pred_fallthru
        _
      %p190 = scmp.le.s32.totalorder 1, %s16
      %p191 = scmp.lt.s32.totalorder %s16, 5
      %p192 = pnand %p190, %p191
      %p193 = pneg %p192
      // Predicated region
      $region33: #{tpu_custom_call.1} parent=5 // pred_check
        _
      $region34: #{tpu_custom_call.1} parent=5 // pred_check_branch
        %195 = sbr.rel (%p192) target = $region36
      $region35: #{tpu_custom_call.1} parent=5 // pred_region
        %s196 = ssub.s32 %s16, 1
        %s197 = sand.u32 %s41, 1
        %s198 = scalar_lea.sflag [#allocation7], %s197
        %s199 = sand.u32 %s41, 1
        %s200 = smul.addr %s199, 8
        %s201 = scalar_lea.vmem [#allocation6], %s200
        // Predicated region
        $region37: #{tpu_custom_call.1} parent=35 // pred_check
          %p202 = pneg %p54
        $region38: #{tpu_custom_call.1} parent=35 // pred_check_branch
          %204 = sbr.rel (%p202) target = $region40
        $region39: #{tpu_custom_call.1} parent=35 // pred_region
          %205 = dma.done %s198, 128
        $region40: #{tpu_custom_call.1} parent=35 // pred_fallthru
          _
        %s206 = sand.u32 %s41, 1
        %s207 = scalar_lea.sflag [#allocation7], %s206
        %s208 = sand.u32 %s41, 1
        %s209 = smul.addr %s208, 8
        %s210 = scalar_lea.vmem [#allocation6], %s209
        %p211 = pneg %p54
        %p212 = pneg %p51
        %p213 = pneg %p75
        %p214 = pneg %p72
        %p215 = pneg %p96
        %p216 = pneg %p93
        %p217 = pneg %p117
        %p218 = pneg %p114
        %p219 = pneg %p143
        %p220 = pneg %p140
        %s221 = sand.u32 %s130, 1
        %s222 = scalar_lea.sflag [#allocation8], %s221
        %s223 = sand.u32 %s130, 1
        %s224 = smul.addr %s223, 16
        %s225 = scalar_lea.vmem [#allocation9], %s224
        %p227 = scmp.eq.s32.totalorder %s25, 0
        %p228 = scmp.eq.s32.totalorder %s26, 0
        %p229 = pnand %p227, %p228
        %p230 = pneg %p229
        // Predicated region
        $region41: #{tpu_custom_call.1} parent=35 // pred_check
          _
        $region42: #{tpu_custom_call.1} parent=35 // pred_check_branch
          %232 = sbr.rel (%p229) target = $region44
        $region43: #{tpu_custom_call.1} parent=35 // pred_region
          %vm233 = vcmask 7168
          %234 = vst.msk [vmem:[#allocation2] sm:$0xff] %vm233, 0.0
          %235 = vst.msk [vmem:[#allocation3] sm:$0xff] %vm233, 0.0
        $region44: #{tpu_custom_call.1} parent=35 // pred_fallthru
          _
        %v236 = vld [vmem:[%s201] sm:$0xff]
        %v238 = vcombine.high %v236, %v236
        %240 = vrot.lane.b32.xlu0 %v236, 17
        %v241 = vpop.permute.xlu0 %240
        %242 = vrot.lane.b32.xlu0 %v238, 17
        %v243 = vpop.permute.xlu0 %242
        %v244 = vlaneseq
        %v245 = vand.u32 %v244, 127
        %vm246 = vcmp.lt.s32.totalorder %v245, 17
        %v247 = vsel %vm246, %v241, %v243
        %v248 = vsel %vm246, %v243, %v241
        %v249 = vld [vmem:[%s2] sm:$0x3]
        %v251 = vlaneseq
        %v252 = vshrl.u32 %v251, 7
        %v253 = vsub.s32 0, %v252
        %v254 = vrot.slane %v249, %v253
        %v255 = vlaneseq
        %v256 = vshrl.u32 %v255, 7
        %v257 = vsub.s32 1, %v256
        %v258 = vrot.slane %v249, %v257
        %v261 = vmul.f32 %v248, %v254
        %v262 = vmul.f32 %v247, %v258
        %263 = vrot.lane.b32.xlu0 %v236, 16
        %v264 = vpop.permute.xlu0 %263
        %265 = vrot.lane.b32.xlu0 %v238, 16
        %v266 = vpop.permute.xlu0 %265
        %vm267 = vcmp.lt.s32.totalorder %v245, 16
        %v268 = vsel %vm267, %v264, %v266
        %v269 = vsel %vm267, %v266, %v264
        %s270 = scalar_lea.vmem %s2, 2
        %v271 = vld [vmem:[%s270] sm:$0x3]
        %v273 = vlaneseq
        %v274 = vshrl.u32 %v273, 7
        %v275 = vsub.s32 0, %v274
        %v276 = vrot.slane %v271, %v275
        %v277 = vlaneseq
        %v278 = vshrl.u32 %v277, 7
        %v279 = vsub.s32 1, %v278
        %v280 = vrot.slane %v271, %v279
        %v283 = vmul.f32 %v269, %v276
        %v284 = vmul.f32 %v268, %v280
        %285 = vrot.lane.b32.xlu0 %v236, 15
        %v286 = vpop.permute.xlu0 %285
        %287 = vrot.lane.b32.xlu0 %v238, 15
        %v288 = vpop.permute.xlu0 %287
        %vm289 = vcmp.lt.s32.totalorder %v245, 15
        %v290 = vsel %vm289, %v286, %v288
        %v291 = vsel %vm289, %v288, %v286
        %s292 = scalar_lea.vmem %s2, 4
        %v293 = vld [vmem:[%s292] sm:$0x3]
        %v295 = vlaneseq
        %v296 = vshrl.u32 %v295, 7
        %v297 = vsub.s32 0, %v296
        %v298 = vrot.slane %v293, %v297
        %v299 = vlaneseq
        %v300 = vshrl.u32 %v299, 7
        %v301 = vsub.s32 1, %v300
        %v302 = vrot.slane %v293, %v301
        %v305 = vmul.f32 %v291, %v298
        %v306 = vmul.f32 %v290, %v302
        %307 = vrot.lane.b32.xlu0 %v236, 1
        %v308 = vpop.permute.xlu0 %307
        %309 = vrot.lane.b32.xlu0 %v238, 1
        %v310 = vpop.permute.xlu0 %309
        %vm311 = vcmp.lt.s32.totalorder %v245, 1
        %v312 = vsel %vm311, %v308, %v310
        %v313 = vsel %vm311, %v310, %v308
        %s314 = scalar_lea.vmem %s2, 6
        %v315 = vld [vmem:[%s314] sm:$0x3]
        %v317 = vlaneseq
        %v318 = vshrl.u32 %v317, 7
        %v319 = vsub.s32 0, %v318
        %v320 = vrot.slane %v315, %v319
        %v321 = vlaneseq
        %v322 = vshrl.u32 %v321, 7
        %v323 = vsub.s32 1, %v322
        %v324 = vrot.slane %v315, %v323
        %v327 = vmul.f32 %v313, %v320
        %v328 = vmul.f32 %v312, %v324
        %329 = vrot.lane.b32.xlu0 %v236, 127
        %v330 = vpop.permute.xlu0 %329
        %331 = vrot.lane.b32.xlu0 %v238, 127
        %v332 = vpop.permute.xlu0 %331
        %vm333 = vcmp.lt.s32.totalorder %v245, 127
        %v334 = vsel %vm333, %v330, %v332
        %v335 = vsel %vm333, %v332, %v330
        %s336 = scalar_lea.vmem %s2, 10
        %v337 = vld [vmem:[%s336] sm:$0x3]
        %v339 = vlaneseq
        %v340 = vshrl.u32 %v339, 7
        %v341 = vsub.s32 0, %v340
        %v342 = vrot.slane %v337, %v341
        %v343 = vlaneseq
        %v344 = vshrl.u32 %v343, 7
        %v345 = vsub.s32 1, %v344
        %v346 = vrot.slane %v337, %v345
        %v349 = vmul.f32 %v334, %v342
        %v350 = vmul.f32 %v335, %v346
        %351 = vrot.lane.b32.xlu0 %v236, 113
        %v352 = vpop.permute.xlu0 %351
        %353 = vrot.lane.b32.xlu0 %v238, 113
        %v354 = vpop.permute.xlu0 %353
        %vm355 = vcmp.lt.s32.totalorder %v245, 113
        %v356 = vsel %vm355, %v352, %v354
        %v357 = vsel %vm355, %v354, %v352
        %s358 = scalar_lea.vmem %s2, 12
        %v359 = vld [vmem:[%s358] sm:$0x3]
        %v361 = vlaneseq
        %v362 = vshrl.u32 %v361, 7
        %v363 = vsub.s32 0, %v362
        %v364 = vrot.slane %v359, %v363
        %v365 = vlaneseq
        %v366 = vshrl.u32 %v365, 7
        %v367 = vsub.s32 1, %v366
        %v368 = vrot.slane %v359, %v367
        %v371 = vmul.f32 %v356, %v364
        %v372 = vmul.f32 %v357, %v368
        %373 = vrot.lane.b32.xlu0 %v236, 112
        %v374 = vpop.permute.xlu0 %373
        %375 = vrot.lane.b32.xlu0 %v238, 112
        %v376 = vpop.permute.xlu0 %375
        %vm377 = vcmp.lt.s32.totalorder %v245, 112
        %v378 = vsel %vm377, %v374, %v376
        %v379 = vsel %vm377, %v376, %v374
        %s380 = scalar_lea.vmem %s2, 14
        %v381 = vld [vmem:[%s380] sm:$0x3]
        %v383 = vlaneseq
        %v384 = vshrl.u32 %v383, 7
        %v385 = vsub.s32 0, %v384
        %v386 = vrot.slane %v381, %v385
        %v387 = vlaneseq
        %v388 = vshrl.u32 %v387, 7
        %v389 = vsub.s32 1, %v388
        %v390 = vrot.slane %v381, %v389
        %v393 = vmul.f32 %v378, %v386
        %v394 = vmul.f32 %v379, %v390
        %395 = vrot.lane.b32.xlu0 %v236, 111
        %v396 = vpop.permute.xlu0 %395
        %397 = vrot.lane.b32.xlu0 %v238, 111
        %v398 = vpop.permute.xlu0 %397
        %vm399 = vcmp.lt.s32.totalorder %v245, 111
        %v400 = vsel %vm399, %v396, %v398
        %v401 = vsel %vm399, %v398, %v396
        %s402 = scalar_lea.vmem %s2, 16
        %v403 = vld [vmem:[%s402] sm:$0x3]
        %v405 = vlaneseq
        %v406 = vshrl.u32 %v405, 7
        %v407 = vsub.s32 0, %v406
        %v408 = vrot.slane %v403, %v407
        %v409 = vlaneseq
        %v410 = vshrl.u32 %v409, 7
        %v411 = vsub.s32 1, %v410
        %v412 = vrot.slane %v403, %v411
        %v415 = vmul.f32 %v400, %v408
        %v416 = vmul.f32 %v401, %v412
        %v419 = vrot.slane %v283, 4
        %v420 = vrot.slane %v284, 4
        %v425 = vrot.slane %v327, 4
        %v426 = vrot.slane %v328, 4
        %v431 = vrot.slane %v349, 4
        %v432 = vrot.slane %v350, 4
        %v437 = vrot.slane %v393, 4
        %v438 = vrot.slane %v394, 4
        %vm441 = vcmask 1043456
        %v442 = vsel %vm441, %v261, %v419
        %v443 = vsel %vm441, %v262, %v420
        %v444 = vsel %vm441, %v305, %v425
        %v445 = vsel %vm441, %v306, %v426
        %v446 = vsel %vm441, %v236, %v431
        %v447 = vsel %vm441, %v238, %v432
        %v448 = vsel %vm441, %v371, %v437
        %v449 = vsel %vm441, %v372, %v438
        %v450 = vpack.c.bf16 %v444, %v442
        %v451 = vpack.c.bf16 %v445, %v443
        %v452 = vpack.c.bf16 %v448, %v446
        %v453 = vpack.c.bf16 %v449, %v447
        %v454 = vpack.c.bf16 %v415, %v415
        %v455 = vpack.c.bf16 %v416, %v416
        %v456 = vld [vmem:[%s1] sm:$0xf]
        %vm457 = vcmask 293888
        %v459 = vsel %vm457, %v456, 0
        %vm461 = vcmask 1041408
        %v463 = vsel %vm461, %v454, 0
        %v466 = vsel %vm461, %v455, 0
        %468 = vmatprep.subr.bf16.mxu0 %v451
        %469 = vmatpush1.bf16.msra.mxu0 %v450
        %470 = vmatprep.subr.bf16.mxu0 %v453
        %471 = vmatpush1.bf16.msra.mxu0 %v452
        %472 = vmatprep.subr.bf16.mxu0 %v466
        %473 = vmatpush1.bf16.msra.mxu0 %v463
        %474 = vmatprep.subr.bf16.mxu0 0
        %475 = vmatpush1.bf16.msra.mxu0 0
        %476 = vmatprep.subr.bf16.mxu0 0
        %477 = vmatpush1.bf16.msra.mxu0 0
        %478 = vmatprep.subr.bf16.mxu0 0
        %479 = vmatpush1.bf16.msra.mxu0 0
        %480 = vmatprep.subr.bf16.mxu0 0
        %481 = vmatpush1.bf16.msra.mxu0 0
        %482 = vmatprep.subr.bf16.mxu0 0
        %483 = vmatpush1.bf16.msra.mxu0 0
        %484 = vmatprep.subr.bf16.mxu0 0
        %485 = vmatpush1.bf16.msra.mxu0 0
        %486 = vmatprep.subr.bf16.mxu0 0
        %487 = vmatpush1.bf16.msra.mxu0 0
        %488 = vmatprep.subr.bf16.mxu0 0
        %489 = vmatpush1.bf16.msra.mxu0 0
        %490 = vmatprep.subr.bf16.mxu0 0
        %491 = vmatpush1.bf16.msra.mxu0 0
        %492 = vmatprep.subr.bf16.mxu0 0
        %493 = vmatpush1.bf16.msra.mxu0 0
        %494 = vmatprep.subr.bf16.mxu0 0
        %495 = vmatpush1.bf16.msra.mxu0 0
        %496 = vmatprep.subr.bf16.mxu0 0
        %497 = vmatpush1.bf16.msra.mxu0 0
        %498 = vmatprep.subr.bf16.mxu0 0
        %499 = vmatpush1.bf16.msra.mxu0 0
        %500 = vmatprep.mubr.bf16.mxu0 0
        %501 = vmatmul.mubr.bf16.gmra.mrb[0].mxu0 %v459
        %v502 = vpop.f32.mrb[0].mxu0
        %v503 = vadd.f32 0.0, %v502
        %v504 = vpop.f32.mrb[0].mxu0
        %v505 = vadd.f32 0.0, %v504
        %v506 = vpop.f32.mrb[0].mxu0
        %v507 = vpop.f32.mrb[0].mxu0
        %508 = vdwg.mxu0
        // Predicated region
        $region45: #{tpu_custom_call.1} parent=35 // pred_check
          %p509 = pneg %p227
        $region46: #{tpu_custom_call.1} parent=35 // pred_check_branch
          %511 = sbr.rel (%p509) target = $region48
        $region47: #{tpu_custom_call.1} parent=35 // pred_region
          %v512 = vld [vmem:[#allocation2] sm:$0xff]
          %v513 = vadd.f32 %v503, %v505
          %514 = vadd.xlane.f32.xlu0 %v513
          %v515 = vpop.xlane.xlu0 %514
          %v516 = vadd.f32 %v512, %v515
          %vm517 = vcmask 7168
          %518 = vst.msk [vmem:[#allocation2] sm:$0xff] %vm517, %v516
          %v519 = vld [vmem:[#allocation3] sm:$0xff]
          %v520 = vmul.f32 %v503, %v503
          %v521 = vmul.f32 %v505, %v505
          %v522 = vadd.f32 %v520, %v521
          %523 = vadd.xlane.f32.xlu0 %v522
          %v524 = vpop.xlane.xlu0 %523
          %v525 = vadd.f32 %v519, %v524
          %526 = vst.msk [vmem:[#allocation3] sm:$0xff] %vm517, %v525
        $region48: #{tpu_custom_call.1} parent=35 // pred_fallthru
          _
        %p527 = scmp.eq.s32.totalorder %s25, 1
        %p528 = pnand %p527, %p228
        %p529 = pneg %p528
        // Predicated region
        $region49: #{tpu_custom_call.1} parent=35 // pred_check
          _
        $region50: #{tpu_custom_call.1} parent=35 // pred_check_branch
          %531 = sbr.rel (%p528) target = $region52
        $region51: #{tpu_custom_call.1} parent=35 // pred_region
          %v532 = vld [vmem:[#allocation2] sm:$0xff]
          %v533 = vmul.f32 %v532, 0.001953125
          %v534 = vld [vmem:[#allocation3] sm:$0xff]
          %v535 = vmul.f32 %v534, 0.001953125
          %v536 = vmul.f32 %v533, %v533
          %v537 = vsub.f32 %v535, %v536
          %v538 = vmax.f32 %v537, 0.0
          %v539 = vadd.f32 %v538, 1e-05
          %v540 = vrsqrt.pop %v539
          %v541 = vld [vmem:[%s3] sm:$0xff]
          %v542 = vmul.f32 %v541, %v540
          %vm543 = vcmask 7168
          %544 = vst.msk [vmem:[#allocation4] sm:$0xff] %vm543, %v542
          %s545 = scalar_lea.vmem %s3, 8
          %v546 = vld [vmem:[%s545] sm:$0xff]
          %v547 = vmul.f32 %v533, %v542
          %v548 = vsub.f32 %v546, %v547
          %549 = vst.msk [vmem:[#allocation5] sm:$0xff] %vm543, %v548
        $region52: #{tpu_custom_call.1} parent=35 // pred_fallthru
          _
        // Predicated region
        $region53: #{tpu_custom_call.1} parent=35 // pred_check
          %p550 = pneg %p527
        $region54: #{tpu_custom_call.1} parent=35 // pred_check_branch
          %552 = sbr.rel (%p550) target = $region56
        $region55: #{tpu_custom_call.1} parent=35 // pred_region
          %v553 = vld [vmem:[#allocation4] sm:$0xff]
          %555 = vset.pattern.permute.xlu0 0
          %556 = vperm.xlu0 %555, %v553
          %v557 = vpop.permute.xlu0 %556
          %v559 = vmul.f32 %v503, %v557
          %v560 = vmul.f32 %v505, %v557
          %v561 = vld [vmem:[#allocation5] sm:$0xff]
          %563 = vset.pattern.permute.xlu0 0
          %564 = vperm.xlu0 %563, %v561
          %v565 = vpop.permute.xlu0 %564
          %v567 = vadd.f32 %v559, %v565
          %v568 = vadd.f32 %v560, %v565
          %v569 = vmax.f32 %v567, 0.0
          %v570 = vmax.f32 %v568, 0.0
          %v571 = vmin.f32 %v569, 6.0
          %v572 = vmin.f32 %v570, 6.0
          %573 = vst [vmem:[%s225] sm:$0xff] %v571
          %574 = vst [vmem:[%s225 + $0x8] sm:$0xff] %v572
        $region56: #{tpu_custom_call.1} parent=35 // pred_fallthru
          _
        %s575 = sand.u32 %s130, 1
        %s576 = scalar_lea.sflag [#allocation8], %s575
        %s577 = sand.u32 %s130, 1
        %s578 = smul.addr %s577, 16
        %s579 = scalar_lea.vmem [#allocation9], %s578
        // Predicated region
        $region57: #{tpu_custom_call.1} parent=35 // pred_check
          %p580 = pneg %p140
        $region58: #{tpu_custom_call.1} parent=35 // pred_check_branch
          %582 = sbr.rel (%p580) target = $region60
        $region59: #{tpu_custom_call.1} parent=35 // pred_region
          %s584 = ssub.s32 256, 256
          %585 = vsyncadd %s576, %s584
          %s586 = smul.addr %s26, 2
          %s587 = smul.addr %s586, 128
          %s588 = scalar_lea.hbm %s4, %s587
          %s590 = sshll.u32 %s579, 4
          %s591 = int_to_ptr.vmem [resolvable:$true] %s590
          %593 = dma.vmem_to_hbm [thread:$0]  %s591, 256, %s588, %s576
        $region60: #{tpu_custom_call.1} parent=35 // pred_fallthru
          _
      $region36: #{tpu_custom_call.1} parent=5 // pred_fallthru
        _
      %p594 = scmp.le.s32.totalorder 2, %s16
      // Predicated region
      $region61: #{tpu_custom_call.1} parent=5 // pred_check
        %p595 = pneg %p594
      $region62: #{tpu_custom_call.1} parent=5 // pred_check_branch
        %597 = sbr.rel (%p595) target = $region64
      $region63: #{tpu_custom_call.1} parent=5 // pred_region
        %s598 = ssub.s32 %s16, 2
        // Predicated region
        $region65: #{tpu_custom_call.1} parent=63 // pred_check
          %p599 = pneg %p146
        $region66: #{tpu_custom_call.1} parent=63 // pred_check_branch
          %601 = sbr.rel (%p599) target = $region68
        $region67: #{tpu_custom_call.1} parent=63 // pred_region
          %s602 = sand.u32 %s131, 1
          %s603 = scalar_lea.sflag [#allocation8], %s602
          %s604 = sand.u32 %s131, 1
          %s605 = smul.addr %s604, 16
          %s606 = scalar_lea.vmem [#allocation9], %s605
          %607 = dma.done %s603, 256
        $region68: #{tpu_custom_call.1} parent=63 // pred_fallthru
          _
      $region64: #{tpu_custom_call.1} parent=5 // pred_fallthru
        _
    $region6: #{tpu_custom_call.1} parent=1 // loop_footer
      %s20 = sadd.s32 1, %s16
    $region7: #{tpu_custom_call.1} parent=1 // loop_footer_branch
      %15 = sbr.rel target = $region3
    $region8: #{tpu_custom_call.1} parent=1 // loop_exit
      _
    %608 = vsyncpa [#allocation7], 1
    %s609 = scalar_lea.sflag [#allocation7], 1
    %610 = vsyncpa %s609, 1
    %611 = vsyncpa [#allocation8], 1
    %s612 = scalar_lea.sflag [#allocation8], 1
    %613 = vsyncpa %s612, 1

</llo_original>
